<compile_context>
chip_gen: v5e
topology: v5e:2x2
jax: 0.10.0
libtpu: 0.0.40
codegen_flags: <defaults>
</compile_context>

<pallas_src>
import functools

import jax
import jax.numpy as jnp
from jax.experimental import pallas as pl
from jax.experimental.pallas import tpu as pltpu

HIDDEN = 256


def _round_up(x, m):
    return (x + m - 1) // m * m


def _cdiv(a, b):
    return -(-a // b)


def tactor_kernel(x_ref, w_ref, b_ref, o_ref, *, s_pad):
    """x_ref: (TB, s_pad) bf16, w_ref: (s_pad + 4*256, 256) bf16,
    b_ref: (8, 256) f32, o_ref: (TB, s_pad) f32."""
    r1 = s_pad
    r2 = s_pad + HIDDEN
    r3 = s_pad + 2 * HIDDEN
    r4 = s_pad + 3 * HIDDEN
    r5 = s_pad + 4 * HIDDEN

    def layer(h_bf16, row_lo, row_hi, bias_row, relu):
        acc = jnp.dot(h_bf16, w_ref[row_lo:row_hi, :],
                      preferred_element_type=jnp.float32)   # MXU, f32 accum
        acc = acc + b_ref[bias_row:bias_row + 1, :]           # f32 bias add
        return jnp.maximum(acc, 0.0) if relu else acc         # f32 ReLU

    h = x_ref[...]                                            # (TB, s_pad) bf16
    h = layer(h, 0, r1, 0, True).astype(jnp.bfloat16)         # l1 + relu
    h = layer(h, r1, r2, 1, True).astype(jnp.bfloat16)        # l2 + relu
    h = layer(h, r2, r3, 2, True).astype(jnp.bfloat16)        # l3 + relu
    h = layer(h, r3, r4, 3, True).astype(jnp.bfloat16)        # l4 + relu
    out = layer(h, r4, r5, 4, False)                          # l5 -> (TB, 256) f32
    # s_pad is a multiple of 128, so this slice is lane-tile aligned.
    o_ref[...] = out[:, :s_pad].astype(o_ref.dtype)


def pack_params(params, state_dim):
    """Pack the 5 weight matrices into one bf16 slab and the 5 biases into one
    f32 slab.  The feature dim is padded to a multiple of 128 (lane width) so
    every in-kernel slice / store is lane-tile aligned."""
    # TODO(synk): slab layout assumes state_dim <= HIDDEN (true for typical RL
    # state dims); wider state dims would need a wider slab.
    assert state_dim <= HIDDEN
    s_pad = _round_up(state_dim, 128)
    w1 = jnp.zeros((s_pad, HIDDEN), jnp.float32).at[:state_dim, :].set(params["w1"])
    w5 = jnp.zeros((HIDDEN, HIDDEN), jnp.float32).at[:, :state_dim].set(params["w5"])
    w_slab = jnp.concatenate(
        [w1, params["w2"], params["w3"], params["w4"], w5], axis=0
    ).astype(jnp.bfloat16)

    b5 = jnp.zeros((1, HIDDEN), jnp.float32).at[:, :state_dim].set(params["b5"])
    b_slab = jnp.concatenate(
        [params["b1"], params["b2"], params["b3"], params["b4"], b5,
         jnp.zeros((3, HIDDEN), jnp.float32)], axis=0)        # pad to 8 rows
    return w_slab, b_slab, s_pad


def tactor_forward(state, w_slab, b_slab, state_dim, s_pad, *, tile_b=1024):
    """state: (B, state_dim) f32 -> (B, state_dim) f32."""
    B = state.shape[0]

    # Adaptive batch tiling:
    #   * rows aligned to 16 (bf16 sublane packing),
    #   * >= 2 grid steps when the batch is big enough (v7x: both TensorCores),
    #   * tile size capped at tile_b, padding waste bounded by one tile-align.
    b_min = _round_up(B, 16)
    n_tiles = max(1, _cdiv(b_min, tile_b))
    if b_min >= 32:
        n_tiles = max(n_tiles, 2)
    tb = _round_up(_cdiv(b_min, n_tiles), 16)
    b_pad = n_tiles * tb

    # Pad batch + feature dims once and cast activations to bf16 once.
    x = jnp.zeros((b_pad, s_pad), jnp.bfloat16)
    x = x.at[:B, :state_dim].set(state.astype(jnp.bfloat16))

    kernel = functools.partial(tactor_kernel, s_pad=s_pad)
    out = pl.pallas_call(
        kernel,
        out_shape=jax.ShapeDtypeStruct((b_pad, s_pad), jnp.float32),
        grid=(n_tiles,),
        in_specs=[
            pl.BlockSpec((tb, s_pad), lambda i: (i, 0)),       # activations
            pl.BlockSpec(w_slab.shape, lambda i: (0, 0)),      # weights: resident
            pl.BlockSpec(b_slab.shape, lambda i: (0, 0)),      # biases:  resident
        ],
        out_specs=pl.BlockSpec((tb, s_pad), lambda i: (i, 0)),
        compiler_params=pltpu.CompilerParams(
            dimension_semantics=("parallel",),                 # v7x: shard over TCs
            vmem_limit_bytes=48 * 1024 * 1024,                 # headroom for big tiles (v5e)
        ),
    )(x, w_slab, b_slab)
    return out[:B, :state_dim]


def init_tactor_params(key, state_dim, hidden=HIDDEN):
    """Mimic PyTorch default Linear init (uniform +-1/sqrt(fan_in)).
    Weights stored as (in, out) so y = x @ W + b."""
    dims = [(state_dim, hidden), (hidden, hidden), (hidden, hidden),
            (hidden, hidden), (hidden, state_dim)]
    params = {}
    for i, (fan_in, fan_out) in enumerate(dims, start=1):
        key, kw, kb = jax.random.split(key, 3)
        bound = 1.0 / (fan_in ** 0.5)
        params[f"w{i}"] = jax.random.uniform(
            kw, (fan_in, fan_out), jnp.float32, -bound, bound)
        params[f"b{i}"] = jax.random.uniform(
            kb, (1, fan_out), jnp.float32, -bound, bound)
    return params


def tactor_reference(state, params):
    h = state
    for i in range(1, 5):
        h = jnp.maximum(h @ params[f"w{i}"] + params[f"b{i}"], 0.0)
    return h @ params["w5"] + params["b5"]


if __name__ == "__main__":
    STATE_DIM = 32
    BATCH = 8

    key = jax.random.PRNGKey(0)
    key, kx = jax.random.split(key)
    state = jax.random.normal(kx, (BATCH, STATE_DIM), jnp.float32)
    params = init_tactor_params(key, STATE_DIM)

    w_slab, b_slab, s_pad = pack_params(params, STATE_DIM)
    out = tactor_forward(state, w_slab, b_slab, STATE_DIM, s_pad)
    out = jax.block_until_ready(out)

    ref = tactor_reference(state, params)  # full-f32 reference (torch semantics)
    assert out.shape == (BATCH, STATE_DIM)
    # bf16 weights + bf16 activations through 5 layers -> loosened tolerance
    # vs the full-f32 reference (expected ~1e-2-scale deviation).
    max_err = float(jnp.max(jnp.abs(out - ref)))
    assert jnp.allclose(out, ref, atol=1e-1, rtol=1e-1), max_err

    print("KERNEL_OK")
</pallas_src>

<mosaic_0001>
module attributes {stable_mosaic.version = 11 : i64} {
  func.func @tactor_kernel(%arg0: i32, %arg1: memref<16x128xbf16, #tpu.memory_space<vmem>>, %arg2: memref<1152x256xbf16, #tpu.memory_space<vmem>>, %arg3: memref<8x256xf32, #tpu.memory_space<vmem>>, %arg4: memref<16x128xf32, #tpu.memory_space<vmem>>) attributes {dimension_semantics = [#tpu.dimension_semantics<parallel>], iteration_bounds = array<i64: 1>, scalar_prefetch = 0 : i64, scratch_operands = 0 : i64, tpu.core_type = #tpu.core_type<tc>, window_params = [{transform_indices = @transform_0, window_bounds = array<i64: 16, 128>}, {pipeline_mode = #tpu.pipeline_mode<synchronous>, transform_indices = @transform_1, window_bounds = array<i64: 1152, 256>}, {pipeline_mode = #tpu.pipeline_mode<synchronous>, transform_indices = @transform_2, window_bounds = array<i64: 8, 256>}, {transform_indices = @transform_3, window_bounds = array<i64: 16, 128>}]} {
    %c0 = arith.constant 0 : index
    %c0_0 = arith.constant 0 : index
    %0 = vector.load %arg1[%c0, %c0_0] : memref<16x128xbf16, #tpu.memory_space<vmem>>, vector<16x128xbf16>
    %c0_1 = arith.constant 0 : index
    %c0_2 = arith.constant 0 : index
    %1 = vector.load %arg2[%c0_1, %c0_2] : memref<1152x256xbf16, #tpu.memory_space<vmem>>, vector<128x256xbf16>
    %cst = arith.constant dense<0.000000e+00> : vector<16x256xf32>
    %2 = tpu.matmul %0, %1, %cst {dimension_numbers = #tpu.dot_dimension_numbers<[1], [0], [0], [1], [0, 0, 1, 1], [], []>} : vector<16x128xbf16>, vector<128x256xbf16>, vector<16x256xf32> -> vector<16x256xf32>
    %c0_3 = arith.constant 0 : index
    %c0_4 = arith.constant 0 : index
    %3 = vector.load %arg3[%c0_3, %c0_4] : memref<8x256xf32, #tpu.memory_space<vmem>>, vector<1x256xf32>
    %4 = vector.broadcast %3 : vector<1x256xf32> to vector<16x256xf32>
    %5 = arith.addf %2, %4 : vector<16x256xf32>
    %cst_5 = arith.constant 0.000000e+00 : f32
    %6 = vector.broadcast %cst_5 : f32 to vector<16x256xf32>
    %7 = arith.maximumf %5, %6 : vector<16x256xf32>
    %8 = arith.truncf %7 : vector<16x256xf32> to vector<16x256xbf16>
    %c128 = arith.constant 128 : index
    %c0_6 = arith.constant 0 : index
    %9 = vector.load %arg2[%c128, %c0_6] : memref<1152x256xbf16, #tpu.memory_space<vmem>>, vector<256x256xbf16>
    %cst_7 = arith.constant dense<0.000000e+00> : vector<16x256xf32>
    %10 = tpu.matmul %8, %9, %cst_7 {dimension_numbers = #tpu.dot_dimension_numbers<[1], [0], [0], [1], [0, 0, 1, 1], [], []>} : vector<16x256xbf16>, vector<256x256xbf16>, vector<16x256xf32> -> vector<16x256xf32>
    %c1 = arith.constant 1 : index
    %c0_8 = arith.constant 0 : index
    %11 = vector.load %arg3[%c1, %c0_8] : memref<8x256xf32, #tpu.memory_space<vmem>>, vector<1x256xf32>
    %12 = vector.broadcast %11 : vector<1x256xf32> to vector<16x256xf32>
    %13 = arith.addf %10, %12 : vector<16x256xf32>
    %cst_9 = arith.constant 0.000000e+00 : f32
    %14 = vector.broadcast %cst_9 : f32 to vector<16x256xf32>
    %15 = arith.maximumf %13, %14 : vector<16x256xf32>
    %16 = arith.truncf %15 : vector<16x256xf32> to vector<16x256xbf16>
    %c384 = arith.constant 384 : index
    %c0_10 = arith.constant 0 : index
    %17 = vector.load %arg2[%c384, %c0_10] : memref<1152x256xbf16, #tpu.memory_space<vmem>>, vector<256x256xbf16>
    %cst_11 = arith.constant dense<0.000000e+00> : vector<16x256xf32>
    %18 = tpu.matmul %16, %17, %cst_11 {dimension_numbers = #tpu.dot_dimension_numbers<[1], [0], [0], [1], [0, 0, 1, 1], [], []>} : vector<16x256xbf16>, vector<256x256xbf16>, vector<16x256xf32> -> vector<16x256xf32>
    %c2 = arith.constant 2 : index
    %c0_12 = arith.constant 0 : index
    %19 = vector.load %arg3[%c2, %c0_12] : memref<8x256xf32, #tpu.memory_space<vmem>>, vector<1x256xf32>
    %20 = vector.broadcast %19 : vector<1x256xf32> to vector<16x256xf32>
    %21 = arith.addf %18, %20 : vector<16x256xf32>
    %cst_13 = arith.constant 0.000000e+00 : f32
    %22 = vector.broadcast %cst_13 : f32 to vector<16x256xf32>
    %23 = arith.maximumf %21, %22 : vector<16x256xf32>
    %24 = arith.truncf %23 : vector<16x256xf32> to vector<16x256xbf16>
    %c640 = arith.constant 640 : index
    %c0_14 = arith.constant 0 : index
    %25 = vector.load %arg2[%c640, %c0_14] : memref<1152x256xbf16, #tpu.memory_space<vmem>>, vector<256x256xbf16>
    %cst_15 = arith.constant dense<0.000000e+00> : vector<16x256xf32>
    %26 = tpu.matmul %24, %25, %cst_15 {dimension_numbers = #tpu.dot_dimension_numbers<[1], [0], [0], [1], [0, 0, 1, 1], [], []>} : vector<16x256xbf16>, vector<256x256xbf16>, vector<16x256xf32> -> vector<16x256xf32>
    %c3 = arith.constant 3 : index
    %c0_16 = arith.constant 0 : index
    %27 = vector.load %arg3[%c3, %c0_16] : memref<8x256xf32, #tpu.memory_space<vmem>>, vector<1x256xf32>
    %28 = vector.broadcast %27 : vector<1x256xf32> to vector<16x256xf32>
    %29 = arith.addf %26, %28 : vector<16x256xf32>
    %cst_17 = arith.constant 0.000000e+00 : f32
    %30 = vector.broadcast %cst_17 : f32 to vector<16x256xf32>
    %31 = arith.maximumf %29, %30 : vector<16x256xf32>
    %32 = arith.truncf %31 : vector<16x256xf32> to vector<16x256xbf16>
    %c896 = arith.constant 896 : index
    %c0_18 = arith.constant 0 : index
    %33 = vector.load %arg2[%c896, %c0_18] : memref<1152x256xbf16, #tpu.memory_space<vmem>>, vector<256x256xbf16>
    %cst_19 = arith.constant dense<0.000000e+00> : vector<16x256xf32>
    %34 = tpu.matmul %32, %33, %cst_19 {dimension_numbers = #tpu.dot_dimension_numbers<[1], [0], [0], [1], [0, 0, 1, 1], [], []>} : vector<16x256xbf16>, vector<256x256xbf16>, vector<16x256xf32> -> vector<16x256xf32>
    %c4 = arith.constant 4 : index
    %c0_20 = arith.constant 0 : index
    %35 = vector.load %arg3[%c4, %c0_20] : memref<8x256xf32, #tpu.memory_space<vmem>>, vector<1x256xf32>
    %36 = vector.broadcast %35 : vector<1x256xf32> to vector<16x256xf32>
    %37 = arith.addf %34, %36 : vector<16x256xf32>
    %38 = vector.extract_strided_slice %37 {offsets = [0, 0], sizes = [16, 128], strides = [1, 1]} : vector<16x256xf32> to vector<16x128xf32>
    %c0_21 = arith.constant 0 : index
    %c0_22 = arith.constant 0 : index
    %39 = vector.load %arg4[%c0_21, %c0_22] : memref<16x128xf32, #tpu.memory_space<vmem>>, vector<16x128xf32>
    tpu.vector_store %arg4[%c0_21, %c0_22], %38 {strides = array<i32>} : memref<16x128xf32, #tpu.memory_space<vmem>>, vector<16x128xf32>,
    return
  }
  func.func @transform_0(%arg0: i32) -> (i32, i32) {
    %c0_i32 = arith.constant 0 : i32
    %c0_i32_0 = arith.constant 0 : i32
    return %arg0, %c0_i32 : i32, i32
  }
  func.func @transform_1(%arg0: i32) -> (i32, i32) {
    %c0_i32 = arith.constant 0 : i32
    %c0_i32_0 = arith.constant 0 : i32
    %c0_i32_1 = arith.constant 0 : i32
    return %c0_i32, %c0_i32_0 : i32, i32
  }
  func.func @transform_2(%arg0: i32) -> (i32, i32) {
    %c0_i32 = arith.constant 0 : i32
    %c0_i32_0 = arith.constant 0 : i32
    %c0_i32_1 = arith.constant 0 : i32
    return %c0_i32, %c0_i32_0 : i32, i32
  }
  func.func @transform_3(%arg0: i32) -> (i32, i32) {
    %c0_i32 = arith.constant 0 : i32
    %c0_i32_0 = arith.constant 0 : i32
    return %arg0, %c0_i32 : i32, i32
  }
}

</mosaic_0001>

<llo_original>
// kernel: tpu_custom_call.1
$region0: #{tpu_custom_call.1}
  #allocation0 [shape = 'u32[]', space=smem, size = 0x4, offset = 0x4, fixed_abs, tag = 'smem constant byte address 0x4 - core index']
  #allocation1 [shape = 'u32[72,128]{1,0:T(1,128)}', space=vmem, size = 0x9000, scoped, tag = 'internal scratch']
  %s0 = inlined_call_operand.hbm [shape: bf16[16,128], index: 0, kind: input, shape index: {}]
  %s1 = inlined_call_operand.hbm [shape: bf16[1152,256], index: 1, kind: input, shape index: {}]
  %s2 = inlined_call_operand.hbm [shape: f32[8,256], index: 2, kind: input, shape index: {}]
  %s3 = inlined_call_operand.hbm [shape: f32[16,128], index: 3, kind: output, shape index: {}]
  %s4 = sld [smem:[#allocation0]]
  $region34: #{tpu_custom_call.1} parent=0
    _
  %s6 = ssub.s32 1, %s4
  %s7 = scalar_select 0, %s6, %s4
  $region1: #{tpu_custom_call.1} parent=0
    #allocation2 [shape = 'u8[4096]{0}', space=vmem, size = 0x1000, scoped, tag = 'input window, operand 0, single buffered']
    #allocation3 [shape = 's32[1]{0}', space=sflag, size = 0x4, scoped, tag = 'scoped memory for tpu_custom_call.1']
    #allocation4 [shape = 's32[1]{0}', space=sflag, size = 0x4, scoped, tag = 'scoped memory for tpu_custom_call.1']
    #allocation5 [shape = 'u8[589824]{0}', space=vmem, size = 0x90000, scoped, tag = 'input window, operand 1, single buffered']
    #allocation6 [shape = 's32[1]{0}', space=sflag, size = 0x4, scoped, tag = 'scoped memory for tpu_custom_call.1']
    #allocation7 [shape = 'u8[8192]{0}', space=vmem, size = 0x2000, scoped, tag = 'input window, operand 2, single buffered']
    #allocation8 [shape = 'u8[8192]{0}', space=vmem, size = 0x2000, scoped, tag = 'output window, operand 0, single buffered']
    %8 = vsyncpa [#allocation3], 0
    %9 = vsyncpa [#allocation6], 0
    %10 = vsyncpa [#allocation4], 0
    // Predicated region
    $region2: #{tpu_custom_call.1} parent=1 // pred_check
      _
    $region3: #{tpu_custom_call.1} parent=1 // pred_check_branch
      %12 = sbr.rel (0) target = $region5
    $region4: #{tpu_custom_call.1} parent=1 // pred_region
      %14 = vsyncadd [#allocation3], 0
      %s15 = sshll.u32 %s0, 4
      %s16 = int_to_ptr.hbm [resolvable:$true] %s15
      %s17 = sshll.u32 [#allocation2], 4
      %s18 = int_to_ptr.vmem [resolvable:$true] %s17
      %23 = dma.hbm_to_vmem [thread:$0]  %s16, 128, %s18, [#allocation3], 64, 64, 4
    $region5: #{tpu_custom_call.1} parent=1 // pred_fallthru
      _
    // Predicated region
    $region6: #{tpu_custom_call.1} parent=1 // pred_check
      _
    $region7: #{tpu_custom_call.1} parent=1 // pred_check_branch
      %25 = sbr.rel (0) target = $region9
    $region8: #{tpu_custom_call.1} parent=1 // pred_region
      %27 = vsyncadd [#allocation6], 0
      %s28 = sshll.u32 %s1, 4
      %s29 = int_to_ptr.hbm [resolvable:$true] %s28
      %s30 = sshll.u32 [#allocation5], 4
      %s31 = int_to_ptr.vmem [resolvable:$true] %s30
      %36 = dma.hbm_to_vmem [thread:$0]  %s29, 18432, %s31, [#allocation6], 128, 128, 8
    $region9: #{tpu_custom_call.1} parent=1 // pred_fallthru
      _
    // Predicated region
    $region10: #{tpu_custom_call.1} parent=1 // pred_check
      _
    $region11: #{tpu_custom_call.1} parent=1 // pred_check_branch
      %38 = sbr.rel (0) target = $region13
    $region12: #{tpu_custom_call.1} parent=1 // pred_region
      %40 = vsyncadd [#allocation6], 0
      %s42 = sshll.u32 %s2, 4
      %s43 = int_to_ptr.hbm [resolvable:$true] %s42
      %s44 = sshll.u32 [#allocation7], 4
      %s45 = int_to_ptr.vmem [resolvable:$true] %s44
      %47 = dma.hbm_to_vmem [thread:$0]  %s43, 256, %s45, [#allocation6]
    $region13: #{tpu_custom_call.1} parent=1 // pred_fallthru
      _
    // Predicated region
    $region14: #{tpu_custom_call.1} parent=1 // pred_check
      _
    $region15: #{tpu_custom_call.1} parent=1 // pred_check_branch
      %49 = sbr.rel (0) target = $region17
    $region16: #{tpu_custom_call.1} parent=1 // pred_region
      %51 = dma.done [#allocation3], 128
    $region17: #{tpu_custom_call.1} parent=1 // pred_fallthru
      _
    // Predicated region
    $region18: #{tpu_custom_call.1} parent=1 // pred_check
      _
    $region19: #{tpu_custom_call.1} parent=1 // pred_check_branch
      %53 = sbr.rel (0) target = $region21
    $region20: #{tpu_custom_call.1} parent=1 // pred_region
      %55 = dma.done [#allocation6], 18432
    $region21: #{tpu_custom_call.1} parent=1 // pred_fallthru
      _
    // Predicated region
    $region22: #{tpu_custom_call.1} parent=1 // pred_check
      _
    $region23: #{tpu_custom_call.1} parent=1 // pred_check_branch
      %57 = sbr.rel (0) target = $region25
    $region24: #{tpu_custom_call.1} parent=1 // pred_region
      %59 = dma.done [#allocation6], 256
    $region25: #{tpu_custom_call.1} parent=1 // pred_fallthru
      _
    %v60 = vld [vmem:[#allocation2] sm:$0xf]
    %v61 = vld [vmem:[#allocation2 + $0x4] sm:$0xf]
    %v62 = vld [vmem:[#allocation5] sm:$0xff]
    %v63 = vld [vmem:[#allocation5 + $0x8] sm:$0xff]
    %v64 = vld [vmem:[#allocation5 + $0x10] sm:$0xff]
    %v65 = vld [vmem:[#allocation5 + $0x18] sm:$0xff]
    %v66 = vld [vmem:[#allocation5 + $0x20] sm:$0xff]
    %v67 = vld [vmem:[#allocation5 + $0x28] sm:$0xff]
    %v68 = vld [vmem:[#allocation5 + $0x30] sm:$0xff]
    %v69 = vld [vmem:[#allocation5 + $0x38] sm:$0xff]
    %v70 = vld [vmem:[#allocation5 + $0x40] sm:$0xff]
    %v71 = vld [vmem:[#allocation5 + $0x48] sm:$0xff]
    %v72 = vld [vmem:[#allocation5 + $0x50] sm:$0xff]
    %v73 = vld [vmem:[#allocation5 + $0x58] sm:$0xff]
    %v74 = vld [vmem:[#allocation5 + $0x60] sm:$0xff]
    %v75 = vld [vmem:[#allocation5 + $0x68] sm:$0xff]
    %v76 = vld [vmem:[#allocation5 + $0x70] sm:$0xff]
    %v77 = vld [vmem:[#allocation5 + $0x78] sm:$0xff]
    %v78 = vld [vmem:[#allocation7] ss:$8 sm:$0x3]
    %v80 = vperm.slane %v78, 0
    %v81 = vperm.slane %v78, 1
    %v86 = vunpack.c.l.b16 %v60
    %v87 = vunpack.c.l.b16 %v61
    %v88 = vpack.c.b16 %v87, %v86
    %v106 = vunpack.c.l.b16 %v62
    %v107 = vunpack.c.h.b16 %v62
    %v108 = vunpack.c.l.b16 %v63
    %v109 = vunpack.c.h.b16 %v63
    %v110 = vunpack.c.l.b16 %v64
    %v111 = vunpack.c.h.b16 %v64
    %v112 = vunpack.c.l.b16 %v65
    %v113 = vunpack.c.h.b16 %v65
    %v114 = vunpack.c.l.b16 %v66
    %v115 = vunpack.c.h.b16 %v66
    %v116 = vunpack.c.l.b16 %v67
    %v117 = vunpack.c.h.b16 %v67
    %v118 = vunpack.c.l.b16 %v68
    %v119 = vunpack.c.h.b16 %v68
    %v120 = vunpack.c.l.b16 %v69
    %v121 = vunpack.c.h.b16 %v69
    %v122 = vunpack.c.l.b16 %v70
    %v123 = vunpack.c.h.b16 %v70
    %v124 = vunpack.c.l.b16 %v71
    %v125 = vunpack.c.h.b16 %v71
    %v126 = vunpack.c.l.b16 %v72
    %v127 = vunpack.c.h.b16 %v72
    %v128 = vunpack.c.l.b16 %v73
    %v129 = vunpack.c.h.b16 %v73
    %v130 = vunpack.c.l.b16 %v74
    %v131 = vunpack.c.h.b16 %v74
    %v132 = vunpack.c.l.b16 %v75
    %v133 = vunpack.c.h.b16 %v75
    %v134 = vunpack.c.l.b16 %v76
    %v135 = vunpack.c.h.b16 %v76
    %v136 = vunpack.c.l.b16 %v77
    %v137 = vunpack.c.h.b16 %v77
    %v138 = vpack.c.b16 %v108, %v106
    %v139 = vpack.c.b16 %v109, %v107
    %v140 = vpack.c.b16 %v112, %v110
    %v141 = vpack.c.b16 %v113, %v111
    %v142 = vpack.c.b16 %v116, %v114
    %v143 = vpack.c.b16 %v117, %v115
    %v144 = vpack.c.b16 %v120, %v118
    %v145 = vpack.c.b16 %v121, %v119
    %v146 = vpack.c.b16 %v124, %v122
    %v147 = vpack.c.b16 %v125, %v123
    %v148 = vpack.c.b16 %v128, %v126
    %v149 = vpack.c.b16 %v129, %v127
    %v150 = vpack.c.b16 %v132, %v130
    %v151 = vpack.c.b16 %v133, %v131
    %v152 = vpack.c.b16 %v136, %v134
    %v153 = vpack.c.b16 %v137, %v135
    %170 = vmatpush.bf16.msra.mxu0 %v152
    %171 = vmatpush.bf16.msra.mxu0 %v150
    %172 = vmatpush.bf16.msra.mxu0 %v148
    %173 = vmatpush.bf16.msra.mxu0 %v146
    %174 = vmatpush.bf16.msra.mxu0 %v144
    %175 = vmatpush.bf16.msra.mxu0 %v142
    %176 = vmatpush.bf16.msra.mxu0 %v140
    %177 = vmatpush.bf16.msra.mxu0 %v138
    %178 = vmatmul.bf16.gmra.mxu0 %v88
    %v179 = vpop.f32.mrf.mxu0
    %v180 = vadd.f32 %v80, %v179
    %v181 = vpop.f32.mrf.mxu0
    %v182 = vadd.f32 %v80, %v181
    %183 = vdwg.mxu0
    %184 = vmatpush.bf16.msra.mxu0 %v153
    %185 = vmatpush.bf16.msra.mxu0 %v151
    %186 = vmatpush.bf16.msra.mxu0 %v149
    %187 = vmatpush.bf16.msra.mxu0 %v147
    %188 = vmatpush.bf16.msra.mxu0 %v145
    %189 = vmatpush.bf16.msra.mxu0 %v143
    %190 = vmatpush.bf16.msra.mxu0 %v141
    %191 = vmatpush.bf16.msra.mxu0 %v139
    %192 = vmatmul.bf16.gmra.mxu0 %v88
    %v193 = vpop.f32.mrf.mxu0
    %v194 = vadd.f32 %v81, %v193
    %v195 = vpop.f32.mrf.mxu0
    %v196 = vadd.f32 %v81, %v195
    %197 = vdwg.mxu0
    %v198 = vmax.f32 %v180, 0.0
    %v199 = vmax.f32 %v194, 0.0
    %v200 = vmax.f32 %v182, 0.0
    %v201 = vmax.f32 %v196, 0.0
    %v202 = vpack.c.bf16 %v200, %v198
    %v203 = vpack.c.bf16 %v201, %v199
    %v204 = vld [vmem:[#allocation5 + $0x80] sm:$0xff]
    %v205 = vld [vmem:[#allocation5 + $0x88] sm:$0xff]
    %v206 = vld [vmem:[#allocation5 + $0x90] sm:$0xff]
    %v207 = vld [vmem:[#allocation5 + $0x98] sm:$0xff]
    %v208 = vld [vmem:[#allocation5 + $0xa0] sm:$0xff]
    %v209 = vld [vmem:[#allocation5 + $0xa8] sm:$0xff]
    %v210 = vld [vmem:[#allocation5 + $0xb0] sm:$0xff]
    %v211 = vld [vmem:[#allocation5 + $0xb8] sm:$0xff]
    %v212 = vld [vmem:[#allocation5 + $0xc0] sm:$0xff]
    %v213 = vld [vmem:[#allocation5 + $0xc8] sm:$0xff]
    %v214 = vld [vmem:[#allocation5 + $0xd0] sm:$0xff]
    %v215 = vld [vmem:[#allocation5 + $0xd8] sm:$0xff]
    %v216 = vld [vmem:[#allocation5 + $0xe0] sm:$0xff]
    %v217 = vld [vmem:[#allocation5 + $0xe8] sm:$0xff]
    %v218 = vld [vmem:[#allocation5 + $0xf0] sm:$0xff]
    %v219 = vld [vmem:[#allocation5 + $0xf8] sm:$0xff]
    %v220 = vld [vmem:[#allocation5 + $0x100] sm:$0xff]
    %v221 = vld [vmem:[#allocation5 + $0x108] sm:$0xff]
    %v222 = vld [vmem:[#allocation5 + $0x110] sm:$0xff]
    %v223 = vld [vmem:[#allocation5 + $0x118] sm:$0xff]
    %v224 = vld [vmem:[#allocation5 + $0x120] sm:$0xff]
    %v225 = vld [vmem:[#allocation5 + $0x128] sm:$0xff]
    %v226 = vld [vmem:[#allocation5 + $0x130] sm:$0xff]
    %v227 = vld [vmem:[#allocation5 + $0x138] sm:$0xff]
    %v228 = vld [vmem:[#allocation5 + $0x140] sm:$0xff]
    %v229 = vld [vmem:[#allocation5 + $0x148] sm:$0xff]
    %v230 = vld [vmem:[#allocation5 + $0x150] sm:$0xff]
    %v231 = vld [vmem:[#allocation5 + $0x158] sm:$0xff]
    %v232 = vld [vmem:[#allocation5 + $0x160] sm:$0xff]
    %v233 = vld [vmem:[#allocation5 + $0x168] sm:$0xff]
    %v234 = vld [vmem:[#allocation5 + $0x170] sm:$0xff]
    %v235 = vld [vmem:[#allocation5 + $0x178] sm:$0xff]
    %s236 = scalar_lea.vmem [#allocation7], 1
    %v237 = vld [vmem:[%s236] ss:$8 sm:$0x3]
    %v239 = vperm.slane %v237, 0
    %v240 = vperm.slane %v237, 1
    %v275 = vunpack.c.l.b16 %v204
    %v276 = vunpack.c.h.b16 %v204
    %v277 = vunpack.c.l.b16 %v205
    %v278 = vunpack.c.h.b16 %v205
    %v279 = vunpack.c.l.b16 %v206
    %v280 = vunpack.c.h.b16 %v206
    %v281 = vunpack.c.l.b16 %v207
    %v282 = vunpack.c.h.b16 %v207
    %v283 = vunpack.c.l.b16 %v208
    %v284 = vunpack.c.h.b16 %v208
    %v285 = vunpack.c.l.b16 %v209
    %v286 = vunpack.c.h.b16 %v209
    %v287 = vunpack.c.l.b16 %v210
    %v288 = vunpack.c.h.b16 %v210
    %v289 = vunpack.c.l.b16 %v211
    %v290 = vunpack.c.h.b16 %v211
    %v291 = vunpack.c.l.b16 %v212
    %v292 = vunpack.c.h.b16 %v212
    %v293 = vunpack.c.l.b16 %v213
    %v294 = vunpack.c.h.b16 %v213
    %v295 = vunpack.c.l.b16 %v214
    %v296 = vunpack.c.h.b16 %v214
    %v297 = vunpack.c.l.b16 %v215
    %v298 = vunpack.c.h.b16 %v215
    %v299 = vunpack.c.l.b16 %v216
    %v300 = vunpack.c.h.b16 %v216
    %v301 = vunpack.c.l.b16 %v217
    %v302 = vunpack.c.h.b16 %v217
    %v303 = vunpack.c.l.b16 %v218
    %v304 = vunpack.c.h.b16 %v218
    %v305 = vunpack.c.l.b16 %v219
    %v306 = vunpack.c.h.b16 %v219
    %v307 = vunpack.c.l.b16 %v220
    %v308 = vunpack.c.h.b16 %v220
    %v309 = vunpack.c.l.b16 %v221
    %v310 = vunpack.c.h.b16 %v221
    %v311 = vunpack.c.l.b16 %v222
    %v312 = vunpack.c.h.b16 %v222
    %v313 = vunpack.c.l.b16 %v223
    %v314 = vunpack.c.h.b16 %v223
    %v315 = vunpack.c.l.b16 %v224
    %v316 = vunpack.c.h.b16 %v224
    %v317 = vunpack.c.l.b16 %v225
    %v318 = vunpack.c.h.b16 %v225
    %v319 = vunpack.c.l.b16 %v226
    %v320 = vunpack.c.h.b16 %v226
    %v321 = vunpack.c.l.b16 %v227
    %v322 = vunpack.c.h.b16 %v227
    %v323 = vunpack.c.l.b16 %v228
    %v324 = vunpack.c.h.b16 %v228
    %v325 = vunpack.c.l.b16 %v229
    %v326 = vunpack.c.h.b16 %v229
    %v327 = vunpack.c.l.b16 %v230
    %v328 = vunpack.c.h.b16 %v230
    %v329 = vunpack.c.l.b16 %v231
    %v330 = vunpack.c.h.b16 %v231
    %v331 = vunpack.c.l.b16 %v232
    %v332 = vunpack.c.h.b16 %v232
    %v333 = vunpack.c.l.b16 %v233
    %v334 = vunpack.c.h.b16 %v233
    %v335 = vunpack.c.l.b16 %v234
    %v336 = vunpack.c.h.b16 %v234
    %v337 = vunpack.c.l.b16 %v235
    %v338 = vunpack.c.h.b16 %v235
    %v339 = vpack.c.b16 %v277, %v275
    %v340 = vpack.c.b16 %v278, %v276
    %v341 = vpack.c.b16 %v281, %v279
    %v342 = vpack.c.b16 %v282, %v280
    %v343 = vpack.c.b16 %v285, %v283
    %v344 = vpack.c.b16 %v286, %v284
    %v345 = vpack.c.b16 %v289, %v287
    %v346 = vpack.c.b16 %v290, %v288
    %v347 = vpack.c.b16 %v293, %v291
    %v348 = vpack.c.b16 %v294, %v292
    %v349 = vpack.c.b16 %v297, %v295
    %v350 = vpack.c.b16 %v298, %v296
    %v351 = vpack.c.b16 %v301, %v299
    %v352 = vpack.c.b16 %v302, %v300
    %v353 = vpack.c.b16 %v305, %v303
    %v354 = vpack.c.b16 %v306, %v304
    %v355 = vpack.c.b16 %v309, %v307
    %v356 = vpack.c.b16 %v310, %v308
    %v357 = vpack.c.b16 %v313, %v311
    %v358 = vpack.c.b16 %v314, %v312
    %v359 = vpack.c.b16 %v317, %v315
    %v360 = vpack.c.b16 %v318, %v316
    %v361 = vpack.c.b16 %v321, %v319
    %v362 = vpack.c.b16 %v322, %v320
    %v363 = vpack.c.b16 %v325, %v323
    %v364 = vpack.c.b16 %v326, %v324
    %v365 = vpack.c.b16 %v329, %v327
    %v366 = vpack.c.b16 %v330, %v328
    %v367 = vpack.c.b16 %v333, %v331
    %v368 = vpack.c.b16 %v334, %v332
    %v369 = vpack.c.b16 %v337, %v335
    %v370 = vpack.c.b16 %v338, %v336
    %403 = vmatpush.bf16.msra.mxu0 %v353
    %404 = vmatpush.bf16.msra.mxu0 %v351
    %405 = vmatpush.bf16.msra.mxu0 %v349
    %406 = vmatpush.bf16.msra.mxu0 %v347
    %407 = vmatpush.bf16.msra.mxu0 %v345
    %408 = vmatpush.bf16.msra.mxu0 %v343
    %409 = vmatpush.bf16.msra.mxu0 %v341
    %410 = vmatpush.bf16.msra.mxu0 %v339
    %411 = vmatmul.bf16.gmra.mxu0 %v202
    %v412 = vpop.f32.mrf.mxu0
    %v413 = vadd.f32 %v239, %v412
    %v414 = vpop.f32.mrf.mxu0
    %v415 = vadd.f32 %v239, %v414
    %416 = vdwg.mxu0
    %417 = vmatpush.bf16.msra.mxu0 %v369
    %418 = vmatpush.bf16.msra.mxu0 %v367
    %419 = vmatpush.bf16.msra.mxu0 %v365
    %420 = vmatpush.bf16.msra.mxu0 %v363
    %421 = vmatpush.bf16.msra.mxu0 %v361
    %422 = vmatpush.bf16.msra.mxu0 %v359
    %423 = vmatpush.bf16.msra.mxu0 %v357
    %424 = vmatpush.bf16.msra.mxu0 %v355
    %425 = vmatmul.bf16.gmra.mxu0 %v203
    %v426 = vpop.f32.mrf.mxu0
    %v427 = vadd.f32 %v413, %v426
    %v428 = vpop.f32.mrf.mxu0
    %v429 = vadd.f32 %v415, %v428
    %430 = vdwg.mxu0
    %431 = vmatpush.bf16.msra.mxu0 %v354
    %432 = vmatpush.bf16.msra.mxu0 %v352
    %433 = vmatpush.bf16.msra.mxu0 %v350
    %434 = vmatpush.bf16.msra.mxu0 %v348
    %435 = vmatpush.bf16.msra.mxu0 %v346
    %436 = vmatpush.bf16.msra.mxu0 %v344
    %437 = vmatpush.bf16.msra.mxu0 %v342
    %438 = vmatpush.bf16.msra.mxu0 %v340
    %439 = vmatmul.bf16.gmra.mxu0 %v202
    %v440 = vpop.f32.mrf.mxu0
    %v441 = vadd.f32 %v240, %v440
    %v442 = vpop.f32.mrf.mxu0
    %v443 = vadd.f32 %v240, %v442
    %444 = vdwg.mxu0
    %445 = vmatpush.bf16.msra.mxu0 %v370
    %446 = vmatpush.bf16.msra.mxu0 %v368
    %447 = vmatpush.bf16.msra.mxu0 %v366
    %448 = vmatpush.bf16.msra.mxu0 %v364
    %449 = vmatpush.bf16.msra.mxu0 %v362
    %450 = vmatpush.bf16.msra.mxu0 %v360
    %451 = vmatpush.bf16.msra.mxu0 %v358
    %452 = vmatpush.bf16.msra.mxu0 %v356
    %453 = vmatmul.bf16.gmra.mxu0 %v203
    %v454 = vpop.f32.mrf.mxu0
    %v455 = vadd.f32 %v441, %v454
    %v456 = vpop.f32.mrf.mxu0
    %v457 = vadd.f32 %v443, %v456
    %458 = vdwg.mxu0
    %v459 = vmax.f32 %v427, 0.0
    %v460 = vmax.f32 %v455, 0.0
    %v461 = vmax.f32 %v429, 0.0
    %v462 = vmax.f32 %v457, 0.0
    %v463 = vpack.c.bf16 %v461, %v459
    %v464 = vpack.c.bf16 %v462, %v460
    %v465 = vld [vmem:[#allocation5 + $0x180] sm:$0xff]
    %v466 = vld [vmem:[#allocation5 + $0x188] sm:$0xff]
    %v467 = vld [vmem:[#allocation5 + $0x190] sm:$0xff]
    %v468 = vld [vmem:[#allocation5 + $0x198] sm:$0xff]
    %v469 = vld [vmem:[#allocation5 + $0x1a0] sm:$0xff]
    %v470 = vld [vmem:[#allocation5 + $0x1a8] sm:$0xff]
    %v471 = vld [vmem:[#allocation5 + $0x1b0] sm:$0xff]
    %v472 = vld [vmem:[#allocation5 + $0x1b8] sm:$0xff]
    %v473 = vld [vmem:[#allocation5 + $0x1c0] sm:$0xff]
    %v474 = vld [vmem:[#allocation5 + $0x1c8] sm:$0xff]
    %v475 = vld [vmem:[#allocation5 + $0x1d0] sm:$0xff]
    %v476 = vld [vmem:[#allocation5 + $0x1d8] sm:$0xff]
    %v477 = vld [vmem:[#allocation5 + $0x1e0] sm:$0xff]
    %v478 = vld [vmem:[#allocation5 + $0x1e8] sm:$0xff]
    %v479 = vld [vmem:[#allocation5 + $0x1f0] sm:$0xff]
    %v480 = vld [vmem:[#allocation5 + $0x1f8] sm:$0xff]
    %v481 = vld [vmem:[#allocation5 + $0x200] sm:$0xff]
    %v482 = vld [vmem:[#allocation5 + $0x208] sm:$0xff]
    %v483 = vld [vmem:[#allocation5 + $0x210] sm:$0xff]
    %v484 = vld [vmem:[#allocation5 + $0x218] sm:$0xff]
    %v485 = vld [vmem:[#allocation5 + $0x220] sm:$0xff]
    %v486 = vld [vmem:[#allocation5 + $0x228] sm:$0xff]
    %v487 = vld [vmem:[#allocation5 + $0x230] sm:$0xff]
    %v488 = vld [vmem:[#allocation5 + $0x238] sm:$0xff]
    %v489 = vld [vmem:[#allocation5 + $0x240] sm:$0xff]
    %v490 = vld [vmem:[#allocation5 + $0x248] sm:$0xff]
    %v491 = vld [vmem:[#allocation5 + $0x250] sm:$0xff]
    %v492 = vld [vmem:[#allocation5 + $0x258] sm:$0xff]
    %v493 = vld [vmem:[#allocation5 + $0x260] sm:$0xff]
    %v494 = vld [vmem:[#allocation5 + $0x268] sm:$0xff]
    %v495 = vld [vmem:[#allocation5 + $0x270] sm:$0xff]
    %v496 = vld [vmem:[#allocation5 + $0x278] sm:$0xff]
    %s497 = scalar_lea.vmem [#allocation7], 2
    %v498 = vld [vmem:[%s497] ss:$8 sm:$0x3]
    %v500 = vperm.slane %v498, 0
    %v501 = vperm.slane %v498, 1
    %v536 = vunpack.c.l.b16 %v465
    %v537 = vunpack.c.h.b16 %v465
    %v538 = vunpack.c.l.b16 %v466
    %v539 = vunpack.c.h.b16 %v466
    %v540 = vunpack.c.l.b16 %v467
    %v541 = vunpack.c.h.b16 %v467
    %v542 = vunpack.c.l.b16 %v468
    %v543 = vunpack.c.h.b16 %v468
    %v544 = vunpack.c.l.b16 %v469
    %v545 = vunpack.c.h.b16 %v469
    %v546 = vunpack.c.l.b16 %v470
    %v547 = vunpack.c.h.b16 %v470
    %v548 = vunpack.c.l.b16 %v471
    %v549 = vunpack.c.h.b16 %v471
    %v550 = vunpack.c.l.b16 %v472
    %v551 = vunpack.c.h.b16 %v472
    %v552 = vunpack.c.l.b16 %v473
    %v553 = vunpack.c.h.b16 %v473
    %v554 = vunpack.c.l.b16 %v474
    %v555 = vunpack.c.h.b16 %v474
    %v556 = vunpack.c.l.b16 %v475
    %v557 = vunpack.c.h.b16 %v475
    %v558 = vunpack.c.l.b16 %v476
    %v559 = vunpack.c.h.b16 %v476
    %v560 = vunpack.c.l.b16 %v477
    %v561 = vunpack.c.h.b16 %v477
    %v562 = vunpack.c.l.b16 %v478
    %v563 = vunpack.c.h.b16 %v478
    %v564 = vunpack.c.l.b16 %v479
    %v565 = vunpack.c.h.b16 %v479
    %v566 = vunpack.c.l.b16 %v480
    %v567 = vunpack.c.h.b16 %v480
    %v568 = vunpack.c.l.b16 %v481
    %v569 = vunpack.c.h.b16 %v481
    %v570 = vunpack.c.l.b16 %v482
    %v571 = vunpack.c.h.b16 %v482
    %v572 = vunpack.c.l.b16 %v483
    %v573 = vunpack.c.h.b16 %v483
    %v574 = vunpack.c.l.b16 %v484
    %v575 = vunpack.c.h.b16 %v484
    %v576 = vunpack.c.l.b16 %v485
    %v577 = vunpack.c.h.b16 %v485
    %v578 = vunpack.c.l.b16 %v486
    %v579 = vunpack.c.h.b16 %v486
    %v580 = vunpack.c.l.b16 %v487
    %v581 = vunpack.c.h.b16 %v487
    %v582 = vunpack.c.l.b16 %v488
    %v583 = vunpack.c.h.b16 %v488
    %v584 = vunpack.c.l.b16 %v489
    %v585 = vunpack.c.h.b16 %v489
    %v586 = vunpack.c.l.b16 %v490
    %v587 = vunpack.c.h.b16 %v490
    %v588 = vunpack.c.l.b16 %v491
    %v589 = vunpack.c.h.b16 %v491
    %v590 = vunpack.c.l.b16 %v492
    %v591 = vunpack.c.h.b16 %v492
    %v592 = vunpack.c.l.b16 %v493
    %v593 = vunpack.c.h.b16 %v493
    %v594 = vunpack.c.l.b16 %v494
    %v595 = vunpack.c.h.b16 %v494
    %v596 = vunpack.c.l.b16 %v495
    %v597 = vunpack.c.h.b16 %v495
    %v598 = vunpack.c.l.b16 %v496
    %v599 = vunpack.c.h.b16 %v496
    %v600 = vpack.c.b16 %v538, %v536
    %v601 = vpack.c.b16 %v539, %v537
    %v602 = vpack.c.b16 %v542, %v540
    %v603 = vpack.c.b16 %v543, %v541
    %v604 = vpack.c.b16 %v546, %v544
    %v605 = vpack.c.b16 %v547, %v545
    %v606 = vpack.c.b16 %v550, %v548
    %v607 = vpack.c.b16 %v551, %v549
    %v608 = vpack.c.b16 %v554, %v552
    %v609 = vpack.c.b16 %v555, %v553
    %v610 = vpack.c.b16 %v558, %v556
    %v611 = vpack.c.b16 %v559, %v557
    %v612 = vpack.c.b16 %v562, %v560
    %v613 = vpack.c.b16 %v563, %v561
    %v614 = vpack.c.b16 %v566, %v564
    %v615 = vpack.c.b16 %v567, %v565
    %v616 = vpack.c.b16 %v570, %v568
    %v617 = vpack.c.b16 %v571, %v569
    %v618 = vpack.c.b16 %v574, %v572
    %v619 = vpack.c.b16 %v575, %v573
    %v620 = vpack.c.b16 %v578, %v576
    %v621 = vpack.c.b16 %v579, %v577
    %v622 = vpack.c.b16 %v582, %v580
    %v623 = vpack.c.b16 %v583, %v581
    %v624 = vpack.c.b16 %v586, %v584
    %v625 = vpack.c.b16 %v587, %v585
    %v626 = vpack.c.b16 %v590, %v588
    %v627 = vpack.c.b16 %v591, %v589
    %v628 = vpack.c.b16 %v594, %v592
    %v629 = vpack.c.b16 %v595, %v593
    %v630 = vpack.c.b16 %v598, %v596
    %v631 = vpack.c.b16 %v599, %v597
    %664 = vmatpush.bf16.msra.mxu0 %v614
    %665 = vmatpush.bf16.msra.mxu0 %v612
    %666 = vmatpush.bf16.msra.mxu0 %v610
    %667 = vmatpush.bf16.msra.mxu0 %v608
    %668 = vmatpush.bf16.msra.mxu0 %v606
    %669 = vmatpush.bf16.msra.mxu0 %v604
    %670 = vmatpush.bf16.msra.mxu0 %v602
    %671 = vmatpush.bf16.msra.mxu0 %v600
    %672 = vmatmul.bf16.gmra.mxu0 %v463
    %v673 = vpop.f32.mrf.mxu0
    %v674 = vadd.f32 %v500, %v673
    %v675 = vpop.f32.mrf.mxu0
    %v676 = vadd.f32 %v500, %v675
    %677 = vdwg.mxu0
    %678 = vmatpush.bf16.msra.mxu0 %v630
    %679 = vmatpush.bf16.msra.mxu0 %v628
    %680 = vmatpush.bf16.msra.mxu0 %v626
    %681 = vmatpush.bf16.msra.mxu0 %v624
    %682 = vmatpush.bf16.msra.mxu0 %v622
    %683 = vmatpush.bf16.msra.mxu0 %v620
    %684 = vmatpush.bf16.msra.mxu0 %v618
    %685 = vmatpush.bf16.msra.mxu0 %v616
    %686 = vmatmul.bf16.gmra.mxu0 %v464
    %v687 = vpop.f32.mrf.mxu0
    %v688 = vadd.f32 %v674, %v687
    %v689 = vpop.f32.mrf.mxu0
    %v690 = vadd.f32 %v676, %v689
    %691 = vdwg.mxu0
    %692 = vmatpush.bf16.msra.mxu0 %v615
    %693 = vmatpush.bf16.msra.mxu0 %v613
    %694 = vmatpush.bf16.msra.mxu0 %v611
    %695 = vmatpush.bf16.msra.mxu0 %v609
    %696 = vmatpush.bf16.msra.mxu0 %v607
    %697 = vmatpush.bf16.msra.mxu0 %v605
    %698 = vmatpush.bf16.msra.mxu0 %v603
    %699 = vmatpush.bf16.msra.mxu0 %v601
    %700 = vmatmul.bf16.gmra.mxu0 %v463
    %v701 = vpop.f32.mrf.mxu0
    %v702 = vadd.f32 %v501, %v701
    %v703 = vpop.f32.mrf.mxu0
    %v704 = vadd.f32 %v501, %v703
    %705 = vdwg.mxu0
    %706 = vmatpush.bf16.msra.mxu0 %v631
    %707 = vmatpush.bf16.msra.mxu0 %v629
    %708 = vmatpush.bf16.msra.mxu0 %v627
    %709 = vmatpush.bf16.msra.mxu0 %v625
    %710 = vmatpush.bf16.msra.mxu0 %v623
    %711 = vmatpush.bf16.msra.mxu0 %v621
    %712 = vmatpush.bf16.msra.mxu0 %v619
    %713 = vmatpush.bf16.msra.mxu0 %v617
    %714 = vmatmul.bf16.gmra.mxu0 %v464
    %v715 = vpop.f32.mrf.mxu0
    %v716 = vadd.f32 %v702, %v715
    %v717 = vpop.f32.mrf.mxu0
    %v718 = vadd.f32 %v704, %v717
    %719 = vdwg.mxu0
    %v720 = vmax.f32 %v688, 0.0
    %v721 = vmax.f32 %v716, 0.0
    %v722 = vmax.f32 %v690, 0.0
    %v723 = vmax.f32 %v718, 0.0
    %v724 = vpack.c.bf16 %v722, %v720
    %v725 = vpack.c.bf16 %v723, %v721
    %v726 = vld [vmem:[#allocation5 + $0x280] sm:$0xff]
    %v727 = vld [vmem:[#allocation5 + $0x288] sm:$0xff]
    %v728 = vld [vmem:[#allocation5 + $0x290] sm:$0xff]
    %v729 = vld [vmem:[#allocation5 + $0x298] sm:$0xff]
    %v730 = vld [vmem:[#allocation5 + $0x2a0] sm:$0xff]
    %v731 = vld [vmem:[#allocation5 + $0x2a8] sm:$0xff]
    %v732 = vld [vmem:[#allocation5 + $0x2b0] sm:$0xff]
    %v733 = vld [vmem:[#allocation5 + $0x2b8] sm:$0xff]
    %v734 = vld [vmem:[#allocation5 + $0x2c0] sm:$0xff]
    %v735 = vld [vmem:[#allocation5 + $0x2c8] sm:$0xff]
    %v736 = vld [vmem:[#allocation5 + $0x2d0] sm:$0xff]
    %v737 = vld [vmem:[#allocation5 + $0x2d8] sm:$0xff]
    %v738 = vld [vmem:[#allocation5 + $0x2e0] sm:$0xff]
    %v739 = vld [vmem:[#allocation5 + $0x2e8] sm:$0xff]
    %v740 = vld [vmem:[#allocation5 + $0x2f0] sm:$0xff]
    %v741 = vld [vmem:[#allocation5 + $0x2f8] sm:$0xff]
    %v742 = vld [vmem:[#allocation5 + $0x300] sm:$0xff]
    %v743 = vld [vmem:[#allocation5 + $0x308] sm:$0xff]
    %v744 = vld [vmem:[#allocation5 + $0x310] sm:$0xff]
    %v745 = vld [vmem:[#allocation5 + $0x318] sm:$0xff]
    %v746 = vld [vmem:[#allocation5 + $0x320] sm:$0xff]
    %v747 = vld [vmem:[#allocation5 + $0x328] sm:$0xff]
    %v748 = vld [vmem:[#allocation5 + $0x330] sm:$0xff]
    %v749 = vld [vmem:[#allocation5 + $0x338] sm:$0xff]
    %v750 = vld [vmem:[#allocation5 + $0x340] sm:$0xff]
    %v751 = vld [vmem:[#allocation5 + $0x348] sm:$0xff]
    %v752 = vld [vmem:[#allocation5 + $0x350] sm:$0xff]
    %v753 = vld [vmem:[#allocation5 + $0x358] sm:$0xff]
    %v754 = vld [vmem:[#allocation5 + $0x360] sm:$0xff]
    %v755 = vld [vmem:[#allocation5 + $0x368] sm:$0xff]
    %v756 = vld [vmem:[#allocation5 + $0x370] sm:$0xff]
    %v757 = vld [vmem:[#allocation5 + $0x378] sm:$0xff]
    %s758 = scalar_lea.vmem [#allocation7], 3
    %v759 = vld [vmem:[%s758] ss:$8 sm:$0x3]
    %v761 = vperm.slane %v759, 0
    %v762 = vperm.slane %v759, 1
    %v797 = vunpack.c.l.b16 %v726
    %v798 = vunpack.c.h.b16 %v726
    %v799 = vunpack.c.l.b16 %v727
    %v800 = vunpack.c.h.b16 %v727
    %v801 = vunpack.c.l.b16 %v728
    %v802 = vunpack.c.h.b16 %v728
    %v803 = vunpack.c.l.b16 %v729
    %v804 = vunpack.c.h.b16 %v729
    %v805 = vunpack.c.l.b16 %v730
    %v806 = vunpack.c.h.b16 %v730
    %v807 = vunpack.c.l.b16 %v731
    %v808 = vunpack.c.h.b16 %v731
    %v809 = vunpack.c.l.b16 %v732
    %v810 = vunpack.c.h.b16 %v732
    %v811 = vunpack.c.l.b16 %v733
    %v812 = vunpack.c.h.b16 %v733
    %v813 = vunpack.c.l.b16 %v734
    %v814 = vunpack.c.h.b16 %v734
    %v815 = vunpack.c.l.b16 %v735
    %v816 = vunpack.c.h.b16 %v735
    %v817 = vunpack.c.l.b16 %v736
    %v818 = vunpack.c.h.b16 %v736
    %v819 = vunpack.c.l.b16 %v737
    %v820 = vunpack.c.h.b16 %v737
    %v821 = vunpack.c.l.b16 %v738
    %v822 = vunpack.c.h.b16 %v738
    %v823 = vunpack.c.l.b16 %v739
    %v824 = vunpack.c.h.b16 %v739
    %v825 = vunpack.c.l.b16 %v740
    %v826 = vunpack.c.h.b16 %v740
    %v827 = vunpack.c.l.b16 %v741
    %v828 = vunpack.c.h.b16 %v741
    %v829 = vunpack.c.l.b16 %v742
    %v830 = vunpack.c.h.b16 %v742
    %v831 = vunpack.c.l.b16 %v743
    %v832 = vunpack.c.h.b16 %v743
    %v833 = vunpack.c.l.b16 %v744
    %v834 = vunpack.c.h.b16 %v744
    %v835 = vunpack.c.l.b16 %v745
    %v836 = vunpack.c.h.b16 %v745
    %v837 = vunpack.c.l.b16 %v746
    %v838 = vunpack.c.h.b16 %v746
    %v839 = vunpack.c.l.b16 %v747
    %v840 = vunpack.c.h.b16 %v747
    %v841 = vunpack.c.l.b16 %v748
    %v842 = vunpack.c.h.b16 %v748
    %v843 = vunpack.c.l.b16 %v749
    %v844 = vunpack.c.h.b16 %v749
    %v845 = vunpack.c.l.b16 %v750
    %v846 = vunpack.c.h.b16 %v750
    %v847 = vunpack.c.l.b16 %v751
    %v848 = vunpack.c.h.b16 %v751
    %v849 = vunpack.c.l.b16 %v752
    %v850 = vunpack.c.h.b16 %v752
    %v851 = vunpack.c.l.b16 %v753
    %v852 = vunpack.c.h.b16 %v753
    %v853 = vunpack.c.l.b16 %v754
    %v854 = vunpack.c.h.b16 %v754
    %v855 = vunpack.c.l.b16 %v755
    %v856 = vunpack.c.h.b16 %v755
    %v857 = vunpack.c.l.b16 %v756
    %v858 = vunpack.c.h.b16 %v756
    %v859 = vunpack.c.l.b16 %v757
    %v860 = vunpack.c.h.b16 %v757
    %v861 = vpack.c.b16 %v799, %v797
    %v862 = vpack.c.b16 %v800, %v798
    %v863 = vpack.c.b16 %v803, %v801
    %v864 = vpack.c.b16 %v804, %v802
    %v865 = vpack.c.b16 %v807, %v805
    %v866 = vpack.c.b16 %v808, %v806
    %v867 = vpack.c.b16 %v811, %v809
    %v868 = vpack.c.b16 %v812, %v810
    %v869 = vpack.c.b16 %v815, %v813
    %v870 = vpack.c.b16 %v816, %v814
    %v871 = vpack.c.b16 %v819, %v817
    %v872 = vpack.c.b16 %v820, %v818
    %v873 = vpack.c.b16 %v823, %v821
    %v874 = vpack.c.b16 %v824, %v822
    %v875 = vpack.c.b16 %v827, %v825
    %v876 = vpack.c.b16 %v828, %v826
    %v877 = vpack.c.b16 %v831, %v829
    %v878 = vpack.c.b16 %v832, %v830
    %v879 = vpack.c.b16 %v835, %v833
    %v880 = vpack.c.b16 %v836, %v834
    %v881 = vpack.c.b16 %v839, %v837
    %v882 = vpack.c.b16 %v840, %v838
    %v883 = vpack.c.b16 %v843, %v841
    %v884 = vpack.c.b16 %v844, %v842
    %v885 = vpack.c.b16 %v847, %v845
    %v886 = vpack.c.b16 %v848, %v846
    %v887 = vpack.c.b16 %v851, %v849
    %v888 = vpack.c.b16 %v852, %v850
    %v889 = vpack.c.b16 %v855, %v853
    %v890 = vpack.c.b16 %v856, %v854
    %v891 = vpack.c.b16 %v859, %v857
    %v892 = vpack.c.b16 %v860, %v858
    %925 = vmatpush.bf16.msra.mxu0 %v875
    %926 = vmatpush.bf16.msra.mxu0 %v873
    %927 = vmatpush.bf16.msra.mxu0 %v871
    %928 = vmatpush.bf16.msra.mxu0 %v869
    %929 = vmatpush.bf16.msra.mxu0 %v867
    %930 = vmatpush.bf16.msra.mxu0 %v865
    %931 = vmatpush.bf16.msra.mxu0 %v863
    %932 = vmatpush.bf16.msra.mxu0 %v861
    %933 = vmatmul.bf16.gmra.mxu0 %v724
    %v934 = vpop.f32.mrf.mxu0
    %v935 = vadd.f32 %v761, %v934
    %v936 = vpop.f32.mrf.mxu0
    %v937 = vadd.f32 %v761, %v936
    %938 = vdwg.mxu0
    %939 = vmatpush.bf16.msra.mxu0 %v891
    %940 = vmatpush.bf16.msra.mxu0 %v889
    %941 = vmatpush.bf16.msra.mxu0 %v887
    %942 = vmatpush.bf16.msra.mxu0 %v885
    %943 = vmatpush.bf16.msra.mxu0 %v883
    %944 = vmatpush.bf16.msra.mxu0 %v881
    %945 = vmatpush.bf16.msra.mxu0 %v879
    %946 = vmatpush.bf16.msra.mxu0 %v877
    %947 = vmatmul.bf16.gmra.mxu0 %v725
    %v948 = vpop.f32.mrf.mxu0
    %v949 = vadd.f32 %v935, %v948
    %v950 = vpop.f32.mrf.mxu0
    %v951 = vadd.f32 %v937, %v950
    %952 = vdwg.mxu0
    %953 = vmatpush.bf16.msra.mxu0 %v876
    %954 = vmatpush.bf16.msra.mxu0 %v874
    %955 = vmatpush.bf16.msra.mxu0 %v872
    %956 = vmatpush.bf16.msra.mxu0 %v870
    %957 = vmatpush.bf16.msra.mxu0 %v868
    %958 = vmatpush.bf16.msra.mxu0 %v866
    %959 = vmatpush.bf16.msra.mxu0 %v864
    %960 = vmatpush.bf16.msra.mxu0 %v862
    %961 = vmatmul.bf16.gmra.mxu0 %v724
    %v962 = vpop.f32.mrf.mxu0
    %v963 = vadd.f32 %v762, %v962
    %v964 = vpop.f32.mrf.mxu0
    %v965 = vadd.f32 %v762, %v964
    %966 = vdwg.mxu0
    %967 = vmatpush.bf16.msra.mxu0 %v892
    %968 = vmatpush.bf16.msra.mxu0 %v890
    %969 = vmatpush.bf16.msra.mxu0 %v888
    %970 = vmatpush.bf16.msra.mxu0 %v886
    %971 = vmatpush.bf16.msra.mxu0 %v884
    %972 = vmatpush.bf16.msra.mxu0 %v882
    %973 = vmatpush.bf16.msra.mxu0 %v880
    %974 = vmatpush.bf16.msra.mxu0 %v878
    %975 = vmatmul.bf16.gmra.mxu0 %v725
    %v976 = vpop.f32.mrf.mxu0
    %v977 = vadd.f32 %v963, %v976
    %v978 = vpop.f32.mrf.mxu0
    %v979 = vadd.f32 %v965, %v978
    %980 = vdwg.mxu0
    %v981 = vmax.f32 %v949, 0.0
    %v982 = vmax.f32 %v977, 0.0
    %v983 = vmax.f32 %v951, 0.0
    %v984 = vmax.f32 %v979, 0.0
    %v985 = vpack.c.bf16 %v983, %v981
    %v986 = vpack.c.bf16 %v984, %v982
    %v987 = vld [vmem:[#allocation5 + $0x380] sm:$0xff]
    %v988 = vld [vmem:[#allocation5 + $0x388] sm:$0xff]
    %v989 = vld [vmem:[#allocation5 + $0x390] sm:$0xff]
    %v990 = vld [vmem:[#allocation5 + $0x398] sm:$0xff]
    %v991 = vld [vmem:[#allocation5 + $0x3a0] sm:$0xff]
    %v992 = vld [vmem:[#allocation5 + $0x3a8] sm:$0xff]
    %v993 = vld [vmem:[#allocation5 + $0x3b0] sm:$0xff]
    %v994 = vld [vmem:[#allocation5 + $0x3b8] sm:$0xff]
    %v995 = vld [vmem:[#allocation5 + $0x3c0] sm:$0xff]
    %v996 = vld [vmem:[#allocation5 + $0x3c8] sm:$0xff]
    %v997 = vld [vmem:[#allocation5 + $0x3d0] sm:$0xff]
    %v998 = vld [vmem:[#allocation5 + $0x3d8] sm:$0xff]
    %v999 = vld [vmem:[#allocation5 + $0x3e0] sm:$0xff]
    %v1000 = vld [vmem:[#allocation5 + $0x3e8] sm:$0xff]
    %v1001 = vld [vmem:[#allocation5 + $0x3f0] sm:$0xff]
    %v1002 = vld [vmem:[#allocation5 + $0x3f8] sm:$0xff]
    %v1003 = vld [vmem:[#allocation5 + $0x400] sm:$0xff]
    %v1004 = vld [vmem:[#allocation5 + $0x408] sm:$0xff]
    %v1005 = vld [vmem:[#allocation5 + $0x410] sm:$0xff]
    %v1006 = vld [vmem:[#allocation5 + $0x418] sm:$0xff]
    %v1007 = vld [vmem:[#allocation5 + $0x420] sm:$0xff]
    %v1008 = vld [vmem:[#allocation5 + $0x428] sm:$0xff]
    %v1009 = vld [vmem:[#allocation5 + $0x430] sm:$0xff]
    %v1010 = vld [vmem:[#allocation5 + $0x438] sm:$0xff]
    %v1011 = vld [vmem:[#allocation5 + $0x440] sm:$0xff]
    %v1012 = vld [vmem:[#allocation5 + $0x448] sm:$0xff]
    %v1013 = vld [vmem:[#allocation5 + $0x450] sm:$0xff]
    %v1014 = vld [vmem:[#allocation5 + $0x458] sm:$0xff]
    %v1015 = vld [vmem:[#allocation5 + $0x460] sm:$0xff]
    %v1016 = vld [vmem:[#allocation5 + $0x468] sm:$0xff]
    %v1017 = vld [vmem:[#allocation5 + $0x470] sm:$0xff]
    %v1018 = vld [vmem:[#allocation5 + $0x478] sm:$0xff]
    %s1019 = scalar_lea.vmem [#allocation7], 4
    %v1020 = vld [vmem:[%s1019] ss:$8 sm:$0x3]
    %v1022 = vperm.slane %v1020, 0
    %v1056 = vunpack.c.l.b16 %v987
    %v1057 = vunpack.c.l.b16 %v988
    %v1058 = vunpack.c.l.b16 %v989
    %v1059 = vunpack.c.l.b16 %v990
    %v1060 = vunpack.c.l.b16 %v991
    %v1061 = vunpack.c.l.b16 %v992
    %v1062 = vunpack.c.l.b16 %v993
    %v1063 = vunpack.c.l.b16 %v994
    %v1064 = vunpack.c.l.b16 %v995
    %v1065 = vunpack.c.l.b16 %v996
    %v1066 = vunpack.c.l.b16 %v997
    %v1067 = vunpack.c.l.b16 %v998
    %v1068 = vunpack.c.l.b16 %v999
    %v1069 = vunpack.c.l.b16 %v1000
    %v1070 = vunpack.c.l.b16 %v1001
    %v1071 = vunpack.c.l.b16 %v1002
    %v1072 = vunpack.c.l.b16 %v1003
    %v1073 = vunpack.c.l.b16 %v1004
    %v1074 = vunpack.c.l.b16 %v1005
    %v1075 = vunpack.c.l.b16 %v1006
    %v1076 = vunpack.c.l.b16 %v1007
    %v1077 = vunpack.c.l.b16 %v1008
    %v1078 = vunpack.c.l.b16 %v1009
    %v1079 = vunpack.c.l.b16 %v1010
    %v1080 = vunpack.c.l.b16 %v1011
    %v1081 = vunpack.c.l.b16 %v1012
    %v1082 = vunpack.c.l.b16 %v1013
    %v1083 = vunpack.c.l.b16 %v1014
    %v1084 = vunpack.c.l.b16 %v1015
    %v1085 = vunpack.c.l.b16 %v1016
    %v1086 = vunpack.c.l.b16 %v1017
    %v1087 = vunpack.c.l.b16 %v1018
    %v1088 = vpack.c.b16 %v1057, %v1056
    %v1089 = vpack.c.b16 %v1059, %v1058
    %v1090 = vpack.c.b16 %v1061, %v1060
    %v1091 = vpack.c.b16 %v1063, %v1062
    %v1092 = vpack.c.b16 %v1065, %v1064
    %v1093 = vpack.c.b16 %v1067, %v1066
    %v1094 = vpack.c.b16 %v1069, %v1068
    %v1095 = vpack.c.b16 %v1071, %v1070
    %v1096 = vpack.c.b16 %v1073, %v1072
    %v1097 = vpack.c.b16 %v1075, %v1074
    %v1098 = vpack.c.b16 %v1077, %v1076
    %v1099 = vpack.c.b16 %v1079, %v1078
    %v1100 = vpack.c.b16 %v1081, %v1080
    %v1101 = vpack.c.b16 %v1083, %v1082
    %v1102 = vpack.c.b16 %v1085, %v1084
    %v1103 = vpack.c.b16 %v1087, %v1086
    %1120 = vmatpush.bf16.msra.mxu0 %v1095
    %1121 = vmatpush.bf16.msra.mxu0 %v1094
    %1122 = vmatpush.bf16.msra.mxu0 %v1093
    %1123 = vmatpush.bf16.msra.mxu0 %v1092
    %1124 = vmatpush.bf16.msra.mxu0 %v1091
    %1125 = vmatpush.bf16.msra.mxu0 %v1090
    %1126 = vmatpush.bf16.msra.mxu0 %v1089
    %1127 = vmatpush.bf16.msra.mxu0 %v1088
    %1128 = vmatmul.bf16.gmra.mxu0 %v985
    %v1129 = vpop.f32.mrf.mxu0
    %v1130 = vadd.f32 %v1022, %v1129
    %v1131 = vpop.f32.mrf.mxu0
    %v1132 = vadd.f32 %v1022, %v1131
    %1133 = vdwg.mxu0
    %1134 = vmatpush.bf16.msra.mxu0 %v1103
    %1135 = vmatpush.bf16.msra.mxu0 %v1102
    %1136 = vmatpush.bf16.msra.mxu0 %v1101
    %1137 = vmatpush.bf16.msra.mxu0 %v1100
    %1138 = vmatpush.bf16.msra.mxu0 %v1099
    %1139 = vmatpush.bf16.msra.mxu0 %v1098
    %1140 = vmatpush.bf16.msra.mxu0 %v1097
    %1141 = vmatpush.bf16.msra.mxu0 %v1096
    %1142 = vmatmul.bf16.gmra.mxu0 %v986
    %v1143 = vpop.f32.mrf.mxu0
    %v1144 = vadd.f32 %v1130, %v1143
    %v1145 = vpop.f32.mrf.mxu0
    %v1146 = vadd.f32 %v1132, %v1145
    %1147 = vdwg.mxu0
    %1148 = vst [vmem:[#allocation8] sm:$0xff] %v1144
    %1149 = vst [vmem:[#allocation8 + $0x8] sm:$0xff] %v1146
    // Predicated region
    $region26: #{tpu_custom_call.1} parent=1 // pred_check
      _
    $region27: #{tpu_custom_call.1} parent=1 // pred_check_branch
      %1151 = sbr.rel (0) target = $region29
    $region28: #{tpu_custom_call.1} parent=1 // pred_region
      %1153 = vsyncadd [#allocation4], 0
      %s1154 = sshll.u32 [#allocation8], 4
      %s1155 = int_to_ptr.vmem [resolvable:$true] %s1154
      %s1156 = sshll.u32 %s3, 4
      %s1157 = int_to_ptr.hbm [resolvable:$true] %s1156
      %1162 = dma.vmem_to_hbm [thread:$0]  %s1155, 256, %s1157, [#allocation4], 128, 128, 8
    $region29: #{tpu_custom_call.1} parent=1 // pred_fallthru
      _
    // Predicated region
    $region30: #{tpu_custom_call.1} parent=1 // pred_check
      _
    $region31: #{tpu_custom_call.1} parent=1 // pred_check_branch
      %1164 = sbr.rel (0) target = $region33
    $region32: #{tpu_custom_call.1} parent=1 // pred_region
      %1166 = dma.done [#allocation4], 256
    $region33: #{tpu_custom_call.1} parent=1 // pred_fallthru
      _
    %1167 = vsyncpa [#allocation3], 1
    %1168 = vsyncpa [#allocation6], 1
    %1169 = vsyncpa [#allocation4], 1

</llo_original>
